<compile_context>
chip_gen: v6e
topology: v6e:2x2x1
jax: 0.10.0
libtpu: 0.0.40
codegen_flags: <defaults>
</compile_context>

<pallas_src>
import jax
import jax.numpy as jnp
from jax import lax
from jax.experimental import pallas as pl
from jax.experimental.pallas import tpu as pltpu


def _round_up(x, m):
    return (x + m - 1) // m * m


# ----------------------------------------------------------------------------
# Kernel 1: forward hot path of the wrapped module
#           conv(3x3, pad=1) + bias + ReLU as one lane-dense MXU matmul
# ----------------------------------------------------------------------------
def _conv_matmul_kernel(patches_ref, w_ref, o_ref):
    # patches_ref: (tm, K_pad)        bf16 im2col rows (+ ones column for bias)
    # w_ref:       (K_pad, Cout_pad)  bf16 flattened conv weight (+ bias row)
    # o_ref:       (tm, Cout_pad)     f32, 128-wide lane-dense output tile
    acc = jnp.dot(patches_ref[...], w_ref[...],
                  preferred_element_type=jnp.float32)
    o_ref[...] = jnp.maximum(acc, 0.0)   # ReLU fused in-kernel


def conv2d_relu_forward(x_nchw, weight, bias):
    """Forward of the wrapped module: Conv2d(Cin->Cout, 3x3, pad=1) + ReLU."""
    N, Cin, H, W = x_nchw.shape
    Cout, _, KH, KW = weight.shape
    pad = 1
    M = N * H * W
    K = KH * KW * Cin

    # --- glue (plain JAX): im2col patch extraction, weight flatten, in bf16 ---
    # TODO(synk): fuse im2col into the kernel (halo-tile DMA + 9 shifted
    # accumulating matmuls) instead of materializing the (M, KH*KW*Cin)
    # patches array in HBM; negligible at these toy shapes.
    x_bf = jnp.transpose(x_nchw, (0, 2, 3, 1)).astype(jnp.bfloat16)   # NHWC
    xp = jnp.pad(x_bf, ((0, 0), (pad, pad), (pad, pad), (0, 0)))
    cols = [xp[:, kh:kh + H, kw:kw + W, :]
            for kh in range(KH) for kw in range(KW)]
    patches = jnp.concatenate(cols, axis=-1).reshape(M, K)
    # Fold bias into the matmul: extra all-ones contraction column on the LHS,
    # bias row on the RHS.
    patches = jnp.concatenate(
        [patches, jnp.ones((M, 1), jnp.bfloat16)], axis=-1)          # (M, K+1)

    # weight (Cout, Cin, KH, KW) -> (KH*KW*Cin, Cout), same (kh, kw, cin) order
    w_mat = jnp.transpose(weight, (2, 3, 1, 0)).reshape(K, Cout)
    w_mat = jnp.concatenate(
        [w_mat, bias.reshape(1, Cout)], axis=0).astype(jnp.bfloat16)  # (K+1, Cout)

    # Lane-aligned, MXU-friendly padding:
    #   K+1  -> K_pad    (multiple of 128)
    #   Cout -> Cout_pad (multiple of 128 => unmasked, lane-dense stores)
    #   M    -> M_pad    (multiple of the row tile; no divisibility assert)
    K_pad = _round_up(K + 1, 128)
    Cout_pad = _round_up(Cout, 128)
    tm = min(_round_up(M, 8), 1024)      # one tile for small M => grid=(1,)
    M_pad = _round_up(M, tm)

    patches_p = jnp.pad(patches, ((0, M_pad - M), (0, K_pad - (K + 1))))
    w_p = jnp.pad(w_mat, ((0, K_pad - (K + 1)), (0, Cout_pad - Cout)))

    out_flat = pl.pallas_call(
        _conv_matmul_kernel,
        out_shape=jax.ShapeDtypeStruct((M_pad, Cout_pad), jnp.float32),
        grid=(M_pad // tm,),
        in_specs=[
            pl.BlockSpec((tm, K_pad), lambda i: (i, 0)),
            pl.BlockSpec((K_pad, Cout_pad), lambda i: (0, 0)),
        ],
        out_specs=pl.BlockSpec((tm, Cout_pad), lambda i: (i, 0)),
        # Tiles here are <1 MiB, far below every generation's scoped-VMEM
        # default (16/32/32 MiB on v5e/v6e/v7x); raise vmem_limit_bytes only
        # when scaling tm/K for production shapes (mind v7x's 64 MiB VMEM).
        compiler_params=pltpu.CompilerParams(
            dimension_semantics=("parallel",)),
    )(patches_p, w_p)

    out = out_flat[:M, :Cout].reshape(N, H, W, Cout)
    return jnp.transpose(out, (0, 3, 1, 2)).astype(x_nchw.dtype)  # back to NCHW


# ----------------------------------------------------------------------------
# Kernel 2: gradient bucket all-reduce semantics (single-host simulation)
#   LegacyDDP flattens grads into a buffer, divides by world_size, all-reduces
#   (SUM).  We simulate with a (world_size, L) stack, tiled along L.
# ----------------------------------------------------------------------------
def _bucket_allreduce_kernel(g_ref, o_ref):
    ws = g_ref.shape[0]
    s = jnp.sum(g_ref[...], axis=0, keepdims=True)   # sum over replicas...
    o_ref[...] = s * (1.0 / ws)                       # ...scale once after


def all_reduce_grad_buffer(grad_stack, *, max_tile=256 * 1024):
    """grad_stack: (world_size, buffer_len) flattened per-replica gradients."""
    ws, L = grad_stack.shape
    # TODO(synk): a real cross-device all-reduce (make_async_remote_copy ring +
    # barrier semaphores) needs a multi-chip mesh; the arithmetic is reproduced
    # here as a tiled, HBM-bandwidth-bound streaming kernel.
    tl = min(_round_up(L, 128), max_tile)   # 128-aligned lane-dense tiles;
    L_pad = _round_up(L, tl)                # double-buffered (ws, tl) blocks
    g = jnp.pad(grad_stack, ((0, 0), (0, L_pad - L)))  # stay under default VMEM
    out = pl.pallas_call(
        _bucket_allreduce_kernel,
        out_shape=jax.ShapeDtypeStruct((1, L_pad), grad_stack.dtype),
        grid=(L_pad // tl,),
        in_specs=[pl.BlockSpec((ws, tl), lambda i: (0, i))],
        out_specs=pl.BlockSpec((1, tl), lambda i: (0, i)),
        compiler_params=pltpu.CompilerParams(
            dimension_semantics=("parallel",)),
    )(g)
    return out[:, :L]


# ----------------------------------------------------------------------------
# LegacyDistributedDataParallel wrapper (forward delegates to the module)
# ----------------------------------------------------------------------------
class LegacyDDP:
    def __init__(self, module_params, world_size=4, buffer_size=2 ** 28):
        self.weight, self.bias = module_params
        # Matches PyTorch: buffer_size is an ELEMENT count, capped at the total
        # number of parameters of the wrapped module.
        total_params = int(self.weight.size + self.bias.size)
        self.buffer_size = min(buffer_size, total_params)
        self.world_size = world_size
        self.accumulate_grads = False

    def forward(self, x):
        # forward() semantics: exactly the wrapped module's forward
        return conv2d_relu_forward(x, self.weight, self.bias)

    def all_reduce_grads(self, per_replica_flat_grads):
        if self.accumulate_grads:   # no_sync semantics
            return per_replica_flat_grads
        return all_reduce_grad_buffer(per_replica_flat_grads)


if __name__ == "__main__":
    key = jax.random.PRNGKey(0)
    k_x, k_w, k_b, k_g = jax.random.split(key, 4)

    N, Cin, H, W = 2, 4, 16, 16
    Cout, KH, KW = 8, 3, 3

    x = jax.random.normal(k_x, (N, Cin, H, W), dtype=jnp.float32)
    weight = (jax.random.normal(k_w, (Cout, Cin, KH, KW), dtype=jnp.float32)
              * (1.0 / jnp.sqrt(Cin * KH * KW)))
    bias = jax.random.normal(k_b, (Cout,), dtype=jnp.float32) * 0.1

    ddp = LegacyDDP((weight, bias), world_size=4)

    # --- forward pass (Pallas kernel) ---
    y = jax.block_until_ready(ddp.forward(x))

    # reference check: same bf16-rounded operands, f32 accumulation
    x_r = x.astype(jnp.bfloat16).astype(jnp.float32)
    w_r = weight.astype(jnp.bfloat16).astype(jnp.float32)
    b_r = bias.astype(jnp.bfloat16).astype(jnp.float32)
    y_ref = lax.conv_general_dilated(
        x_r, w_r, window_strides=(1, 1), padding=((1, 1), (1, 1)),
        dimension_numbers=("NCHW", "OIHW", "NCHW"),
        precision=lax.Precision.HIGHEST)
    y_ref = jnp.maximum(y_ref + b_r.reshape(1, Cout, 1, 1), 0.0)
    assert y.shape == (N, Cout, H, W)
    assert jnp.allclose(y, y_ref, atol=1e-3, rtol=1e-3)

    # --- gradient bucket all-reduce simulation (Pallas kernel) ---
    world_size = 4
    L = ddp.buffer_size  # = total param count (296)
    grad_stack = jax.random.normal(k_g, (world_size, L), dtype=jnp.float32)
    reduced = jax.block_until_ready(ddp.all_reduce_grads(grad_stack))
    reduced_ref = jnp.sum(grad_stack, axis=0, keepdims=True) / world_size
    assert reduced.shape == (1, L)
    assert jnp.allclose(reduced, reduced_ref, atol=1e-5, rtol=1e-5)

    print("KERNEL_OK")
</pallas_src>

<mosaic_0001>
module attributes {stable_mosaic.version = 11 : i64} {
  func.func @_conv_matmul_kernel(%arg0: i32, %arg1: memref<512x128xbf16, #tpu.memory_space<vmem>>, %arg2: memref<128x128xbf16, #tpu.memory_space<vmem>>, %arg3: memref<512x128xf32, #tpu.memory_space<vmem>>) attributes {dimension_semantics = [#tpu.dimension_semantics<parallel>], iteration_bounds = array<i64: 1>, scalar_prefetch = 0 : i64, scratch_operands = 0 : i64, tpu.core_type = #tpu.core_type<tc>, window_params = [{transform_indices = @transform_0, window_bounds = array<i64: 512, 128>}, {pipeline_mode = #tpu.pipeline_mode<synchronous>, transform_indices = @transform_1, window_bounds = array<i64: 128, 128>}, {transform_indices = @transform_2, window_bounds = array<i64: 512, 128>}]} {
    %c0 = arith.constant 0 : index
    %c0_0 = arith.constant 0 : index
    %0 = vector.load %arg1[%c0, %c0_0] : memref<512x128xbf16, #tpu.memory_space<vmem>>, vector<512x128xbf16>
    %c0_1 = arith.constant 0 : index
    %c0_2 = arith.constant 0 : index
    %1 = vector.load %arg2[%c0_1, %c0_2] : memref<128x128xbf16, #tpu.memory_space<vmem>>, vector<128x128xbf16>
    %cst = arith.constant dense<0.000000e+00> : vector<512x128xf32>
    %2 = tpu.matmul %0, %1, %cst {dimension_numbers = #tpu.dot_dimension_numbers<[1], [0], [0], [1], [0, 0, 1, 1], [], []>} : vector<512x128xbf16>, vector<128x128xbf16>, vector<512x128xf32> -> vector<512x128xf32>
    %cst_3 = arith.constant 0.000000e+00 : f32
    %3 = vector.broadcast %cst_3 : f32 to vector<512x128xf32>
    %4 = arith.maximumf %2, %3 : vector<512x128xf32>
    %c0_4 = arith.constant 0 : index
    %c0_5 = arith.constant 0 : index
    %5 = vector.load %arg3[%c0_4, %c0_5] : memref<512x128xf32, #tpu.memory_space<vmem>>, vector<512x128xf32>
    tpu.vector_store %arg3[%c0_4, %c0_5], %4 {strides = array<i32>} : memref<512x128xf32, #tpu.memory_space<vmem>>, vector<512x128xf32>,
    return
  }
  func.func @transform_0(%arg0: i32) -> (i32, i32) {
    %c0_i32 = arith.constant 0 : i32
    %c0_i32_0 = arith.constant 0 : i32
    return %arg0, %c0_i32 : i32, i32
  }
  func.func @transform_1(%arg0: i32) -> (i32, i32) {
    %c0_i32 = arith.constant 0 : i32
    %c0_i32_0 = arith.constant 0 : i32
    %c0_i32_1 = arith.constant 0 : i32
    return %c0_i32, %c0_i32_0 : i32, i32
  }
  func.func @transform_2(%arg0: i32) -> (i32, i32) {
    %c0_i32 = arith.constant 0 : i32
    %c0_i32_0 = arith.constant 0 : i32
    return %arg0, %c0_i32 : i32, i32
  }
}

</mosaic_0001>

<llo_original>
// kernel: tpu_custom_call.1
$region0: #{tpu_custom_call.1}
  #allocation0 [shape = 'u32[]', space=smem, size = 0x4, offset = 0x4, fixed_abs, tag = 'smem constant byte address 0x4 - core index']
  #allocation1 [shape = 'u32[144,128]{1,0:T(1,128)}', space=vmem, size = 0x12000, scoped, tag = 'internal scratch']
  %s0 = inlined_call_operand.hbm [shape: bf16[512,128], index: 0, kind: input, shape index: {}]
  %s1 = inlined_call_operand.hbm [shape: bf16[128,128], index: 1, kind: input, shape index: {}]
  %s2 = inlined_call_operand.hbm [shape: f32[512,128], index: 2, kind: output, shape index: {}]
  %s3 = sld [smem:[#allocation0]]
  $region26: #{tpu_custom_call.1} parent=0
    _
  %s5 = ssub.s32 1, %s3
  %s6 = scalar_select 0, %s5, %s3
  $region1: #{tpu_custom_call.1} parent=0
    #allocation2 [shape = 'u8[131072]{0}', space=vmem, size = 0x20000, scoped, tag = 'input window, operand 0, single buffered']
    #allocation3 [shape = 's32[1]{0}', space=sflag, size = 0x4, scoped, tag = 'scoped memory for tpu_custom_call.1']
    #allocation4 [shape = 's32[1]{0}', space=sflag, size = 0x4, scoped, tag = 'scoped memory for tpu_custom_call.1']
    #allocation5 [shape = 'u8[32768]{0}', space=vmem, size = 0x8000, scoped, tag = 'input window, operand 1, single buffered']
    #allocation6 [shape = 's32[1]{0}', space=sflag, size = 0x4, scoped, tag = 'scoped memory for tpu_custom_call.1']
    #allocation7 [shape = 'u8[262144]{0}', space=vmem, size = 0x40000, scoped, tag = 'output window, operand 0, single buffered']
    %7 = vsyncpa [#allocation3], 0
    %8 = vsyncpa [#allocation6], 0
    %9 = vsyncpa [#allocation4], 0
    // Predicated region
    $region2: #{tpu_custom_call.1} parent=1 // pred_check
      _
    $region3: #{tpu_custom_call.1} parent=1 // pred_check_branch
      %11 = sbr.rel (0) target = $region5
    $region4: #{tpu_custom_call.1} parent=1 // pred_region
      %s13 = ssub.s32 4096, 4096
      %14 = vsyncadd [#allocation3], %s13
      %s15 = sshll.u32 [#allocation2], 4
      %s16 = int_to_ptr.vmem [resolvable:$true] %s15
      %21 = dma.hbm_to_vmem [thread:$0]  %s0, 4096, %s16, [#allocation3], 64, 64, 4
    $region5: #{tpu_custom_call.1} parent=1 // pred_fallthru
      _
    // Predicated region
    $region6: #{tpu_custom_call.1} parent=1 // pred_check
      _
    $region7: #{tpu_custom_call.1} parent=1 // pred_check_branch
      %23 = sbr.rel (0) target = $region9
    $region8: #{tpu_custom_call.1} parent=1 // pred_region
      %s25 = ssub.s32 1024, 1024
      %26 = vsyncadd [#allocation6], %s25
      %s27 = sshll.u32 [#allocation5], 4
      %s28 = int_to_ptr.vmem [resolvable:$true] %s27
      %33 = dma.hbm_to_vmem [thread:$0]  %s1, 1024, %s28, [#allocation6], 64, 64, 4
    $region9: #{tpu_custom_call.1} parent=1 // pred_fallthru
      _
    // Predicated region
    $region10: #{tpu_custom_call.1} parent=1 // pred_check
      _
    $region11: #{tpu_custom_call.1} parent=1 // pred_check_branch
      %35 = sbr.rel (0) target = $region13
    $region12: #{tpu_custom_call.1} parent=1 // pred_region
      %36 = dma.done [#allocation3], 4096
    $region13: #{tpu_custom_call.1} parent=1 // pred_fallthru
      _
    // Predicated region
    $region14: #{tpu_custom_call.1} parent=1 // pred_check
      _
    $region15: #{tpu_custom_call.1} parent=1 // pred_check_branch
      %38 = sbr.rel (0) target = $region17
    $region16: #{tpu_custom_call.1} parent=1 // pred_region
      %39 = dma.done [#allocation6], 1024
    $region17: #{tpu_custom_call.1} parent=1 // pred_fallthru
      _
    %v41 = vld [vmem:[#allocation2] sm:$0xf]
    %v42 = vld [vmem:[#allocation2 + $0x4] sm:$0xf]
    %v43 = vld [vmem:[#allocation2 + $0x8] sm:$0xf]
    %v44 = vld [vmem:[#allocation2 + $0xc] sm:$0xf]
    %v45 = vld [vmem:[#allocation2 + $0x10] sm:$0xf]
    %v46 = vld [vmem:[#allocation2 + $0x14] sm:$0xf]
    %v47 = vld [vmem:[#allocation2 + $0x18] sm:$0xf]
    %v48 = vld [vmem:[#allocation2 + $0x1c] sm:$0xf]
    %v49 = vld [vmem:[#allocation2 + $0x20] sm:$0xf]
    %v50 = vld [vmem:[#allocation2 + $0x24] sm:$0xf]
    %v51 = vld [vmem:[#allocation2 + $0x28] sm:$0xf]
    %v52 = vld [vmem:[#allocation2 + $0x2c] sm:$0xf]
    %v53 = vld [vmem:[#allocation2 + $0x30] sm:$0xf]
    %v54 = vld [vmem:[#allocation2 + $0x34] sm:$0xf]
    %v55 = vld [vmem:[#allocation2 + $0x38] sm:$0xf]
    %v56 = vld [vmem:[#allocation2 + $0x3c] sm:$0xf]
    %v57 = vld [vmem:[#allocation2 + $0x40] sm:$0xf]
    %v58 = vld [vmem:[#allocation2 + $0x44] sm:$0xf]
    %v59 = vld [vmem:[#allocation2 + $0x48] sm:$0xf]
    %v60 = vld [vmem:[#allocation2 + $0x4c] sm:$0xf]
    %v61 = vld [vmem:[#allocation2 + $0x50] sm:$0xf]
    %v62 = vld [vmem:[#allocation2 + $0x54] sm:$0xf]
    %v63 = vld [vmem:[#allocation2 + $0x58] sm:$0xf]
    %v64 = vld [vmem:[#allocation2 + $0x5c] sm:$0xf]
    %v65 = vld [vmem:[#allocation2 + $0x60] sm:$0xf]
    %v66 = vld [vmem:[#allocation2 + $0x64] sm:$0xf]
    %v67 = vld [vmem:[#allocation2 + $0x68] sm:$0xf]
    %v68 = vld [vmem:[#allocation2 + $0x6c] sm:$0xf]
    %v69 = vld [vmem:[#allocation2 + $0x70] sm:$0xf]
    %v70 = vld [vmem:[#allocation2 + $0x74] sm:$0xf]
    %v71 = vld [vmem:[#allocation2 + $0x78] sm:$0xf]
    %v72 = vld [vmem:[#allocation2 + $0x7c] sm:$0xf]
    %v73 = vld [vmem:[#allocation2 + $0x80] sm:$0xf]
    %v74 = vld [vmem:[#allocation2 + $0x84] sm:$0xf]
    %v75 = vld [vmem:[#allocation2 + $0x88] sm:$0xf]
    %v76 = vld [vmem:[#allocation2 + $0x8c] sm:$0xf]
    %v77 = vld [vmem:[#allocation2 + $0x90] sm:$0xf]
    %v78 = vld [vmem:[#allocation2 + $0x94] sm:$0xf]
    %v79 = vld [vmem:[#allocation2 + $0x98] sm:$0xf]
    %v80 = vld [vmem:[#allocation2 + $0x9c] sm:$0xf]
    %v81 = vld [vmem:[#allocation2 + $0xa0] sm:$0xf]
    %v82 = vld [vmem:[#allocation2 + $0xa4] sm:$0xf]
    %v83 = vld [vmem:[#allocation2 + $0xa8] sm:$0xf]
    %v84 = vld [vmem:[#allocation2 + $0xac] sm:$0xf]
    %v85 = vld [vmem:[#allocation2 + $0xb0] sm:$0xf]
    %v86 = vld [vmem:[#allocation2 + $0xb4] sm:$0xf]
    %v87 = vld [vmem:[#allocation2 + $0xb8] sm:$0xf]
    %v88 = vld [vmem:[#allocation2 + $0xbc] sm:$0xf]
    %v89 = vld [vmem:[#allocation2 + $0xc0] sm:$0xf]
    %v90 = vld [vmem:[#allocation2 + $0xc4] sm:$0xf]
    %v91 = vld [vmem:[#allocation2 + $0xc8] sm:$0xf]
    %v92 = vld [vmem:[#allocation2 + $0xcc] sm:$0xf]
    %v93 = vld [vmem:[#allocation2 + $0xd0] sm:$0xf]
    %v94 = vld [vmem:[#allocation2 + $0xd4] sm:$0xf]
    %v95 = vld [vmem:[#allocation2 + $0xd8] sm:$0xf]
    %v96 = vld [vmem:[#allocation2 + $0xdc] sm:$0xf]
    %v97 = vld [vmem:[#allocation2 + $0xe0] sm:$0xf]
    %v98 = vld [vmem:[#allocation2 + $0xe4] sm:$0xf]
    %v99 = vld [vmem:[#allocation2 + $0xe8] sm:$0xf]
    %v100 = vld [vmem:[#allocation2 + $0xec] sm:$0xf]
    %v101 = vld [vmem:[#allocation2 + $0xf0] sm:$0xf]
    %v102 = vld [vmem:[#allocation2 + $0xf4] sm:$0xf]
    %v103 = vld [vmem:[#allocation2 + $0xf8] sm:$0xf]
    %v104 = vld [vmem:[#allocation2 + $0xfc] sm:$0xf]
    %v105 = vld [vmem:[#allocation5] sm:$0xf]
    %v106 = vld [vmem:[#allocation5 + $0x4] sm:$0xf]
    %v107 = vld [vmem:[#allocation5 + $0x8] sm:$0xf]
    %v108 = vld [vmem:[#allocation5 + $0xc] sm:$0xf]
    %v109 = vld [vmem:[#allocation5 + $0x10] sm:$0xf]
    %v110 = vld [vmem:[#allocation5 + $0x14] sm:$0xf]
    %v111 = vld [vmem:[#allocation5 + $0x18] sm:$0xf]
    %v112 = vld [vmem:[#allocation5 + $0x1c] sm:$0xf]
    %v113 = vld [vmem:[#allocation5 + $0x20] sm:$0xf]
    %v114 = vld [vmem:[#allocation5 + $0x24] sm:$0xf]
    %v115 = vld [vmem:[#allocation5 + $0x28] sm:$0xf]
    %v116 = vld [vmem:[#allocation5 + $0x2c] sm:$0xf]
    %v117 = vld [vmem:[#allocation5 + $0x30] sm:$0xf]
    %v118 = vld [vmem:[#allocation5 + $0x34] sm:$0xf]
    %v119 = vld [vmem:[#allocation5 + $0x38] sm:$0xf]
    %v120 = vld [vmem:[#allocation5 + $0x3c] sm:$0xf]
    %v185 = vunpack.c.l.b16 %v41
    %v186 = vunpack.c.l.b16 %v42
    %v187 = vunpack.c.l.b16 %v43
    %v188 = vunpack.c.l.b16 %v44
    %v189 = vunpack.c.l.b16 %v45
    %v190 = vunpack.c.l.b16 %v46
    %v191 = vunpack.c.l.b16 %v47
    %v192 = vunpack.c.l.b16 %v48
    %v193 = vunpack.c.l.b16 %v49
    %v194 = vunpack.c.l.b16 %v50
    %v195 = vunpack.c.l.b16 %v51
    %v196 = vunpack.c.l.b16 %v52
    %v197 = vunpack.c.l.b16 %v53
    %v198 = vunpack.c.l.b16 %v54
    %v199 = vunpack.c.l.b16 %v55
    %v200 = vunpack.c.l.b16 %v56
    %v201 = vunpack.c.l.b16 %v57
    %v202 = vunpack.c.l.b16 %v58
    %v203 = vunpack.c.l.b16 %v59
    %v204 = vunpack.c.l.b16 %v60
    %v205 = vunpack.c.l.b16 %v61
    %v206 = vunpack.c.l.b16 %v62
    %v207 = vunpack.c.l.b16 %v63
    %v208 = vunpack.c.l.b16 %v64
    %v209 = vunpack.c.l.b16 %v65
    %v210 = vunpack.c.l.b16 %v66
    %v211 = vunpack.c.l.b16 %v67
    %v212 = vunpack.c.l.b16 %v68
    %v213 = vunpack.c.l.b16 %v69
    %v214 = vunpack.c.l.b16 %v70
    %v215 = vunpack.c.l.b16 %v71
    %v216 = vunpack.c.l.b16 %v72
    %v217 = vunpack.c.l.b16 %v73
    %v218 = vunpack.c.l.b16 %v74
    %v219 = vunpack.c.l.b16 %v75
    %v220 = vunpack.c.l.b16 %v76
    %v221 = vunpack.c.l.b16 %v77
    %v222 = vunpack.c.l.b16 %v78
    %v223 = vunpack.c.l.b16 %v79
    %v224 = vunpack.c.l.b16 %v80
    %v225 = vunpack.c.l.b16 %v81
    %v226 = vunpack.c.l.b16 %v82
    %v227 = vunpack.c.l.b16 %v83
    %v228 = vunpack.c.l.b16 %v84
    %v229 = vunpack.c.l.b16 %v85
    %v230 = vunpack.c.l.b16 %v86
    %v231 = vunpack.c.l.b16 %v87
    %v232 = vunpack.c.l.b16 %v88
    %v233 = vunpack.c.l.b16 %v89
    %v234 = vunpack.c.l.b16 %v90
    %v235 = vunpack.c.l.b16 %v91
    %v236 = vunpack.c.l.b16 %v92
    %v237 = vunpack.c.l.b16 %v93
    %v238 = vunpack.c.l.b16 %v94
    %v239 = vunpack.c.l.b16 %v95
    %v240 = vunpack.c.l.b16 %v96
    %v241 = vunpack.c.l.b16 %v97
    %v242 = vunpack.c.l.b16 %v98
    %v243 = vunpack.c.l.b16 %v99
    %v244 = vunpack.c.l.b16 %v100
    %v245 = vunpack.c.l.b16 %v101
    %v246 = vunpack.c.l.b16 %v102
    %v247 = vunpack.c.l.b16 %v103
    %v248 = vunpack.c.l.b16 %v104
    %v249 = vpack.c.b16 %v186, %v185
    %v250 = vpack.c.b16 %v188, %v187
    %v251 = vpack.c.b16 %v190, %v189
    %v252 = vpack.c.b16 %v192, %v191
    %v253 = vpack.c.b16 %v194, %v193
    %v254 = vpack.c.b16 %v196, %v195
    %v255 = vpack.c.b16 %v198, %v197
    %v256 = vpack.c.b16 %v200, %v199
    %v257 = vpack.c.b16 %v202, %v201
    %v258 = vpack.c.b16 %v204, %v203
    %v259 = vpack.c.b16 %v206, %v205
    %v260 = vpack.c.b16 %v208, %v207
    %v261 = vpack.c.b16 %v210, %v209
    %v262 = vpack.c.b16 %v212, %v211
    %v263 = vpack.c.b16 %v214, %v213
    %v264 = vpack.c.b16 %v216, %v215
    %v265 = vpack.c.b16 %v218, %v217
    %v266 = vpack.c.b16 %v220, %v219
    %v267 = vpack.c.b16 %v222, %v221
    %v268 = vpack.c.b16 %v224, %v223
    %v269 = vpack.c.b16 %v226, %v225
    %v270 = vpack.c.b16 %v228, %v227
    %v271 = vpack.c.b16 %v230, %v229
    %v272 = vpack.c.b16 %v232, %v231
    %v273 = vpack.c.b16 %v234, %v233
    %v274 = vpack.c.b16 %v236, %v235
    %v275 = vpack.c.b16 %v238, %v237
    %v276 = vpack.c.b16 %v240, %v239
    %v277 = vpack.c.b16 %v242, %v241
    %v278 = vpack.c.b16 %v244, %v243
    %v279 = vpack.c.b16 %v246, %v245
    %v280 = vpack.c.b16 %v248, %v247
    %v329 = vunpack.c.l.b16 %v105
    %v330 = vunpack.c.l.b16 %v106
    %v331 = vunpack.c.l.b16 %v107
    %v332 = vunpack.c.l.b16 %v108
    %v333 = vunpack.c.l.b16 %v109
    %v334 = vunpack.c.l.b16 %v110
    %v335 = vunpack.c.l.b16 %v111
    %v336 = vunpack.c.l.b16 %v112
    %v337 = vunpack.c.l.b16 %v113
    %v338 = vunpack.c.l.b16 %v114
    %v339 = vunpack.c.l.b16 %v115
    %v340 = vunpack.c.l.b16 %v116
    %v341 = vunpack.c.l.b16 %v117
    %v342 = vunpack.c.l.b16 %v118
    %v343 = vunpack.c.l.b16 %v119
    %v344 = vunpack.c.l.b16 %v120
    %v345 = vpack.c.b16 %v330, %v329
    %v346 = vpack.c.b16 %v332, %v331
    %v347 = vpack.c.b16 %v334, %v333
    %v348 = vpack.c.b16 %v336, %v335
    %v349 = vpack.c.b16 %v338, %v337
    %v350 = vpack.c.b16 %v340, %v339
    %v351 = vpack.c.b16 %v342, %v341
    %v352 = vpack.c.b16 %v344, %v343
    %361 = vmatprep.subr.bf16.mxu0 0
    %362 = vmatpush1.bf16.msra.mxu0 %v352
    %363 = vmatprep.subr.bf16.mxu0 0
    %364 = vmatpush1.bf16.msra.mxu0 %v351
    %365 = vmatprep.subr.bf16.mxu0 0
    %366 = vmatpush1.bf16.msra.mxu0 %v350
    %367 = vmatprep.subr.bf16.mxu0 0
    %368 = vmatpush1.bf16.msra.mxu0 %v349
    %369 = vmatprep.subr.bf16.mxu0 0
    %370 = vmatpush1.bf16.msra.mxu0 %v348
    %371 = vmatprep.subr.bf16.mxu0 0
    %372 = vmatpush1.bf16.msra.mxu0 %v347
    %373 = vmatprep.subr.bf16.mxu0 0
    %374 = vmatpush1.bf16.msra.mxu0 %v346
    %375 = vmatprep.subr.bf16.mxu0 0
    %376 = vmatpush1.bf16.msra.mxu0 %v345
    %377 = vmatprep.subr.bf16.mxu0 0
    %378 = vmatpush2.bf16.msra.mxu0 0
    %379 = vmatprep.subr.bf16.mxu0 0
    %380 = vmatpush2.bf16.msra.mxu0 0
    %381 = vmatprep.subr.bf16.mxu0 0
    %382 = vmatpush2.bf16.msra.mxu0 0
    %383 = vmatprep.subr.bf16.mxu0 0
    %384 = vmatpush2.bf16.msra.mxu0 0
    %385 = vmatprep.subr.bf16.mxu0 0
    %386 = vmatpush2.bf16.msra.mxu0 0
    %387 = vmatprep.subr.bf16.mxu0 0
    %388 = vmatpush2.bf16.msra.mxu0 0
    %389 = vmatprep.subr.bf16.mxu0 0
    %390 = vmatpush2.bf16.msra.mxu0 0
    %391 = vmatprep.subr.bf16.mxu0 0
    %392 = vmatpush2.bf16.msra.mxu0 0
    %393 = vmatprep.mubr.bf16.mxu0 0
    %394 = vmatmul.mubr.bf16.gmra.mxu0 %v249
    %v395 = vpop.f32.mrf.mxu0
    %v396 = vadd.f32 0.0, %v395
    %v397 = vpop.f32.mrf.mxu0
    %v398 = vpop.f32.mrf.mxu0
    %v399 = vadd.f32 0.0, %v398
    %v400 = vpop.f32.mrf.mxu0
    %401 = vmatprep.mubr.bf16.mxu0 0
    %402 = vmatmul.mubr.bf16.gmra.mxu0 %v250
    %v403 = vpop.f32.mrf.mxu0
    %v404 = vadd.f32 0.0, %v403
    %v405 = vpop.f32.mrf.mxu0
    %v406 = vpop.f32.mrf.mxu0
    %v407 = vadd.f32 0.0, %v406
    %v408 = vpop.f32.mrf.mxu0
    %409 = vmatprep.mubr.bf16.mxu0 0
    %410 = vmatmul.mubr.bf16.gmra.mxu0 %v251
    %v411 = vpop.f32.mrf.mxu0
    %v412 = vadd.f32 0.0, %v411
    %v413 = vpop.f32.mrf.mxu0
    %v414 = vpop.f32.mrf.mxu0
    %v415 = vadd.f32 0.0, %v414
    %v416 = vpop.f32.mrf.mxu0
    %417 = vmatprep.mubr.bf16.mxu0 0
    %418 = vmatmul.mubr.bf16.gmra.mxu0 %v252
    %v419 = vpop.f32.mrf.mxu0
    %v420 = vadd.f32 0.0, %v419
    %v421 = vpop.f32.mrf.mxu0
    %v422 = vpop.f32.mrf.mxu0
    %v423 = vadd.f32 0.0, %v422
    %v424 = vpop.f32.mrf.mxu0
    %425 = vmatprep.mubr.bf16.mxu0 0
    %426 = vmatmul.mubr.bf16.gmra.mxu0 %v253
    %v427 = vpop.f32.mrf.mxu0
    %v428 = vadd.f32 0.0, %v427
    %v429 = vpop.f32.mrf.mxu0
    %v430 = vpop.f32.mrf.mxu0
    %v431 = vadd.f32 0.0, %v430
    %v432 = vpop.f32.mrf.mxu0
    %433 = vmatprep.mubr.bf16.mxu0 0
    %434 = vmatmul.mubr.bf16.gmra.mxu0 %v254
    %v435 = vpop.f32.mrf.mxu0
    %v436 = vadd.f32 0.0, %v435
    %v437 = vpop.f32.mrf.mxu0
    %v438 = vpop.f32.mrf.mxu0
    %v439 = vadd.f32 0.0, %v438
    %v440 = vpop.f32.mrf.mxu0
    %441 = vmatprep.mubr.bf16.mxu0 0
    %442 = vmatmul.mubr.bf16.gmra.mxu0 %v255
    %v443 = vpop.f32.mrf.mxu0
    %v444 = vadd.f32 0.0, %v443
    %v445 = vpop.f32.mrf.mxu0
    %v446 = vpop.f32.mrf.mxu0
    %v447 = vadd.f32 0.0, %v446
    %v448 = vpop.f32.mrf.mxu0
    %449 = vmatprep.mubr.bf16.mxu0 0
    %450 = vmatmul.mubr.bf16.gmra.mxu0 %v256
    %v451 = vpop.f32.mrf.mxu0
    %v452 = vadd.f32 0.0, %v451
    %v453 = vpop.f32.mrf.mxu0
    %v454 = vpop.f32.mrf.mxu0
    %v455 = vadd.f32 0.0, %v454
    %v456 = vpop.f32.mrf.mxu0
    %457 = vmatprep.mubr.bf16.mxu0 0
    %458 = vmatmul.mubr.bf16.gmra.mxu0 %v257
    %v459 = vpop.f32.mrf.mxu0
    %v460 = vadd.f32 0.0, %v459
    %v461 = vpop.f32.mrf.mxu0
    %v462 = vpop.f32.mrf.mxu0
    %v463 = vadd.f32 0.0, %v462
    %v464 = vpop.f32.mrf.mxu0
    %465 = vmatprep.mubr.bf16.mxu0 0
    %466 = vmatmul.mubr.bf16.gmra.mxu0 %v258
    %v467 = vpop.f32.mrf.mxu0
    %v468 = vadd.f32 0.0, %v467
    %v469 = vpop.f32.mrf.mxu0
    %v470 = vpop.f32.mrf.mxu0
    %v471 = vadd.f32 0.0, %v470
    %v472 = vpop.f32.mrf.mxu0
    %473 = vmatprep.mubr.bf16.mxu0 0
    %474 = vmatmul.mubr.bf16.gmra.mxu0 %v259
    %v475 = vpop.f32.mrf.mxu0
    %v476 = vadd.f32 0.0, %v475
    %v477 = vpop.f32.mrf.mxu0
    %v478 = vpop.f32.mrf.mxu0
    %v479 = vadd.f32 0.0, %v478
    %v480 = vpop.f32.mrf.mxu0
    %481 = vmatprep.mubr.bf16.mxu0 0
    %482 = vmatmul.mubr.bf16.gmra.mxu0 %v260
    %v483 = vpop.f32.mrf.mxu0
    %v484 = vadd.f32 0.0, %v483
    %v485 = vpop.f32.mrf.mxu0
    %v486 = vpop.f32.mrf.mxu0
    %v487 = vadd.f32 0.0, %v486
    %v488 = vpop.f32.mrf.mxu0
    %489 = vmatprep.mubr.bf16.mxu0 0
    %490 = vmatmul.mubr.bf16.gmra.mxu0 %v261
    %v491 = vpop.f32.mrf.mxu0
    %v492 = vadd.f32 0.0, %v491
    %v493 = vpop.f32.mrf.mxu0
    %v494 = vpop.f32.mrf.mxu0
    %v495 = vadd.f32 0.0, %v494
    %v496 = vpop.f32.mrf.mxu0
    %497 = vmatprep.mubr.bf16.mxu0 0
    %498 = vmatmul.mubr.bf16.gmra.mxu0 %v262
    %v499 = vpop.f32.mrf.mxu0
    %v500 = vadd.f32 0.0, %v499
    %v501 = vpop.f32.mrf.mxu0
    %v502 = vpop.f32.mrf.mxu0
    %v503 = vadd.f32 0.0, %v502
    %v504 = vpop.f32.mrf.mxu0
    %505 = vmatprep.mubr.bf16.mxu0 0
    %506 = vmatmul.mubr.bf16.gmra.mxu0 %v263
    %v507 = vpop.f32.mrf.mxu0
    %v508 = vadd.f32 0.0, %v507
    %v509 = vpop.f32.mrf.mxu0
    %v510 = vpop.f32.mrf.mxu0
    %v511 = vadd.f32 0.0, %v510
    %v512 = vpop.f32.mrf.mxu0
    %513 = vmatprep.mubr.bf16.mxu0 0
    %514 = vmatmul.mubr.bf16.gmra.mxu0 %v264
    %v515 = vpop.f32.mrf.mxu0
    %v516 = vadd.f32 0.0, %v515
    %v517 = vpop.f32.mrf.mxu0
    %v518 = vpop.f32.mrf.mxu0
    %v519 = vadd.f32 0.0, %v518
    %v520 = vpop.f32.mrf.mxu0
    %521 = vmatprep.mubr.bf16.mxu0 0
    %522 = vmatmul.mubr.bf16.gmra.mxu0 %v265
    %v523 = vpop.f32.mrf.mxu0
    %v524 = vadd.f32 0.0, %v523
    %v525 = vpop.f32.mrf.mxu0
    %v526 = vpop.f32.mrf.mxu0
    %v527 = vadd.f32 0.0, %v526
    %v528 = vpop.f32.mrf.mxu0
    %529 = vmatprep.mubr.bf16.mxu0 0
    %530 = vmatmul.mubr.bf16.gmra.mxu0 %v266
    %v531 = vpop.f32.mrf.mxu0
    %v532 = vadd.f32 0.0, %v531
    %v533 = vpop.f32.mrf.mxu0
    %v534 = vpop.f32.mrf.mxu0
    %v535 = vadd.f32 0.0, %v534
    %v536 = vpop.f32.mrf.mxu0
    %537 = vmatprep.mubr.bf16.mxu0 0
    %538 = vmatmul.mubr.bf16.gmra.mxu0 %v267
    %v539 = vpop.f32.mrf.mxu0
    %v540 = vadd.f32 0.0, %v539
    %v541 = vpop.f32.mrf.mxu0
    %v542 = vpop.f32.mrf.mxu0
    %v543 = vadd.f32 0.0, %v542
    %v544 = vpop.f32.mrf.mxu0
    %545 = vmatprep.mubr.bf16.mxu0 0
    %546 = vmatmul.mubr.bf16.gmra.mxu0 %v268
    %v547 = vpop.f32.mrf.mxu0
    %v548 = vadd.f32 0.0, %v547
    %v549 = vpop.f32.mrf.mxu0
    %v550 = vpop.f32.mrf.mxu0
    %v551 = vadd.f32 0.0, %v550
    %v552 = vpop.f32.mrf.mxu0
    %553 = vmatprep.mubr.bf16.mxu0 0
    %554 = vmatmul.mubr.bf16.gmra.mxu0 %v269
    %v555 = vpop.f32.mrf.mxu0
    %v556 = vadd.f32 0.0, %v555
    %v557 = vpop.f32.mrf.mxu0
    %v558 = vpop.f32.mrf.mxu0
    %v559 = vadd.f32 0.0, %v558
    %v560 = vpop.f32.mrf.mxu0
    %561 = vmatprep.mubr.bf16.mxu0 0
    %562 = vmatmul.mubr.bf16.gmra.mxu0 %v270
    %v563 = vpop.f32.mrf.mxu0
    %v564 = vadd.f32 0.0, %v563
    %v565 = vpop.f32.mrf.mxu0
    %v566 = vpop.f32.mrf.mxu0
    %v567 = vadd.f32 0.0, %v566
    %v568 = vpop.f32.mrf.mxu0
    %569 = vmatprep.mubr.bf16.mxu0 0
    %570 = vmatmul.mubr.bf16.gmra.mxu0 %v271
    %v571 = vpop.f32.mrf.mxu0
    %v572 = vadd.f32 0.0, %v571
    %v573 = vpop.f32.mrf.mxu0
    %v574 = vpop.f32.mrf.mxu0
    %v575 = vadd.f32 0.0, %v574
    %v576 = vpop.f32.mrf.mxu0
    %577 = vmatprep.mubr.bf16.mxu0 0
    %578 = vmatmul.mubr.bf16.gmra.mxu0 %v272
    %v579 = vpop.f32.mrf.mxu0
    %v580 = vadd.f32 0.0, %v579
    %v581 = vpop.f32.mrf.mxu0
    %v582 = vpop.f32.mrf.mxu0
    %v583 = vadd.f32 0.0, %v582
    %v584 = vpop.f32.mrf.mxu0
    %585 = vmatprep.mubr.bf16.mxu0 0
    %586 = vmatmul.mubr.bf16.gmra.mxu0 %v273
    %v587 = vpop.f32.mrf.mxu0
    %v588 = vadd.f32 0.0, %v587
    %v589 = vpop.f32.mrf.mxu0
    %v590 = vpop.f32.mrf.mxu0
    %v591 = vadd.f32 0.0, %v590
    %v592 = vpop.f32.mrf.mxu0
    %593 = vmatprep.mubr.bf16.mxu0 0
    %594 = vmatmul.mubr.bf16.gmra.mxu0 %v274
    %v595 = vpop.f32.mrf.mxu0
    %v596 = vadd.f32 0.0, %v595
    %v597 = vpop.f32.mrf.mxu0
    %v598 = vpop.f32.mrf.mxu0
    %v599 = vadd.f32 0.0, %v598
    %v600 = vpop.f32.mrf.mxu0
    %601 = vmatprep.mubr.bf16.mxu0 0
    %602 = vmatmul.mubr.bf16.gmra.mxu0 %v275
    %v603 = vpop.f32.mrf.mxu0
    %v604 = vadd.f32 0.0, %v603
    %v605 = vpop.f32.mrf.mxu0
    %v606 = vpop.f32.mrf.mxu0
    %v607 = vadd.f32 0.0, %v606
    %v608 = vpop.f32.mrf.mxu0
    %609 = vmatprep.mubr.bf16.mxu0 0
    %610 = vmatmul.mubr.bf16.gmra.mxu0 %v276
    %v611 = vpop.f32.mrf.mxu0
    %v612 = vadd.f32 0.0, %v611
    %v613 = vpop.f32.mrf.mxu0
    %v614 = vpop.f32.mrf.mxu0
    %v615 = vadd.f32 0.0, %v614
    %v616 = vpop.f32.mrf.mxu0
    %617 = vmatprep.mubr.bf16.mxu0 0
    %618 = vmatmul.mubr.bf16.gmra.mxu0 %v277
    %v619 = vpop.f32.mrf.mxu0
    %v620 = vadd.f32 0.0, %v619
    %v621 = vpop.f32.mrf.mxu0
    %v622 = vpop.f32.mrf.mxu0
    %v623 = vadd.f32 0.0, %v622
    %v624 = vpop.f32.mrf.mxu0
    %625 = vmatprep.mubr.bf16.mxu0 0
    %626 = vmatmul.mubr.bf16.gmra.mxu0 %v278
    %v627 = vpop.f32.mrf.mxu0
    %v628 = vadd.f32 0.0, %v627
    %v629 = vpop.f32.mrf.mxu0
    %v630 = vpop.f32.mrf.mxu0
    %v631 = vadd.f32 0.0, %v630
    %v632 = vpop.f32.mrf.mxu0
    %633 = vmatprep.mubr.bf16.mxu0 0
    %634 = vmatmul.mubr.bf16.gmra.mxu0 %v279
    %v635 = vpop.f32.mrf.mxu0
    %v636 = vadd.f32 0.0, %v635
    %v637 = vpop.f32.mrf.mxu0
    %v638 = vpop.f32.mrf.mxu0
    %v639 = vadd.f32 0.0, %v638
    %v640 = vpop.f32.mrf.mxu0
    %641 = vmatprep.mubr.bf16.mxu0 0
    %642 = vmatmul.mubr.bf16.gmra.mxu0 %v280
    %v643 = vpop.f32.mrf.mxu0
    %v644 = vadd.f32 0.0, %v643
    %v645 = vpop.f32.mrf.mxu0
    %v646 = vpop.f32.mrf.mxu0
    %v647 = vadd.f32 0.0, %v646
    %v648 = vpop.f32.mrf.mxu0
    %649 = vdwg.mxu0
    %v650 = vmax.f32 %v396, 0.0
    %v651 = vmax.f32 %v399, 0.0
    %v652 = vmax.f32 %v404, 0.0
    %v653 = vmax.f32 %v407, 0.0
    %v654 = vmax.f32 %v412, 0.0
    %v655 = vmax.f32 %v415, 0.0
    %v656 = vmax.f32 %v420, 0.0
    %v657 = vmax.f32 %v423, 0.0
    %v658 = vmax.f32 %v428, 0.0
    %v659 = vmax.f32 %v431, 0.0
    %v660 = vmax.f32 %v436, 0.0
    %v661 = vmax.f32 %v439, 0.0
    %v662 = vmax.f32 %v444, 0.0
    %v663 = vmax.f32 %v447, 0.0
    %v664 = vmax.f32 %v452, 0.0
    %v665 = vmax.f32 %v455, 0.0
    %v666 = vmax.f32 %v460, 0.0
    %v667 = vmax.f32 %v463, 0.0
    %v668 = vmax.f32 %v468, 0.0
    %v669 = vmax.f32 %v471, 0.0
    %v670 = vmax.f32 %v476, 0.0
    %v671 = vmax.f32 %v479, 0.0
    %v672 = vmax.f32 %v484, 0.0
    %v673 = vmax.f32 %v487, 0.0
    %v674 = vmax.f32 %v492, 0.0
    %v675 = vmax.f32 %v495, 0.0
    %v676 = vmax.f32 %v500, 0.0
    %v677 = vmax.f32 %v503, 0.0
    %v678 = vmax.f32 %v508, 0.0
    %v679 = vmax.f32 %v511, 0.0
    %v680 = vmax.f32 %v516, 0.0
    %v681 = vmax.f32 %v519, 0.0
    %v682 = vmax.f32 %v524, 0.0
    %v683 = vmax.f32 %v527, 0.0
    %v684 = vmax.f32 %v532, 0.0
    %v685 = vmax.f32 %v535, 0.0
    %v686 = vmax.f32 %v540, 0.0
    %v687 = vmax.f32 %v543, 0.0
    %v688 = vmax.f32 %v548, 0.0
    %v689 = vmax.f32 %v551, 0.0
    %v690 = vmax.f32 %v556, 0.0
    %v691 = vmax.f32 %v559, 0.0
    %v692 = vmax.f32 %v564, 0.0
    %v693 = vmax.f32 %v567, 0.0
    %v694 = vmax.f32 %v572, 0.0
    %v695 = vmax.f32 %v575, 0.0
    %v696 = vmax.f32 %v580, 0.0
    %v697 = vmax.f32 %v583, 0.0
    %v698 = vmax.f32 %v588, 0.0
    %v699 = vmax.f32 %v591, 0.0
    %v700 = vmax.f32 %v596, 0.0
    %v701 = vmax.f32 %v599, 0.0
    %v702 = vmax.f32 %v604, 0.0
    %v703 = vmax.f32 %v607, 0.0
    %v704 = vmax.f32 %v612, 0.0
    %v705 = vmax.f32 %v615, 0.0
    %v706 = vmax.f32 %v620, 0.0
    %v707 = vmax.f32 %v623, 0.0
    %v708 = vmax.f32 %v628, 0.0
    %v709 = vmax.f32 %v631, 0.0
    %v710 = vmax.f32 %v636, 0.0
    %v711 = vmax.f32 %v639, 0.0
    %v712 = vmax.f32 %v644, 0.0
    %v713 = vmax.f32 %v647, 0.0
    %714 = vst [vmem:[#allocation7] sm:$0xff] %v650
    %715 = vst [vmem:[#allocation7 + $0x8] sm:$0xff] %v651
    %716 = vst [vmem:[#allocation7 + $0x10] sm:$0xff] %v652
    %717 = vst [vmem:[#allocation7 + $0x18] sm:$0xff] %v653
    %718 = vst [vmem:[#allocation7 + $0x20] sm:$0xff] %v654
    %719 = vst [vmem:[#allocation7 + $0x28] sm:$0xff] %v655
    %720 = vst [vmem:[#allocation7 + $0x30] sm:$0xff] %v656
    %721 = vst [vmem:[#allocation7 + $0x38] sm:$0xff] %v657
    %722 = vst [vmem:[#allocation7 + $0x40] sm:$0xff] %v658
    %723 = vst [vmem:[#allocation7 + $0x48] sm:$0xff] %v659
    %724 = vst [vmem:[#allocation7 + $0x50] sm:$0xff] %v660
    %725 = vst [vmem:[#allocation7 + $0x58] sm:$0xff] %v661
    %726 = vst [vmem:[#allocation7 + $0x60] sm:$0xff] %v662
    %727 = vst [vmem:[#allocation7 + $0x68] sm:$0xff] %v663
    %728 = vst [vmem:[#allocation7 + $0x70] sm:$0xff] %v664
    %729 = vst [vmem:[#allocation7 + $0x78] sm:$0xff] %v665
    %730 = vst [vmem:[#allocation7 + $0x80] sm:$0xff] %v666
    %731 = vst [vmem:[#allocation7 + $0x88] sm:$0xff] %v667
    %732 = vst [vmem:[#allocation7 + $0x90] sm:$0xff] %v668
    %733 = vst [vmem:[#allocation7 + $0x98] sm:$0xff] %v669
    %734 = vst [vmem:[#allocation7 + $0xa0] sm:$0xff] %v670
    %735 = vst [vmem:[#allocation7 + $0xa8] sm:$0xff] %v671
    %736 = vst [vmem:[#allocation7 + $0xb0] sm:$0xff] %v672
    %737 = vst [vmem:[#allocation7 + $0xb8] sm:$0xff] %v673
    %738 = vst [vmem:[#allocation7 + $0xc0] sm:$0xff] %v674
    %739 = vst [vmem:[#allocation7 + $0xc8] sm:$0xff] %v675
    %740 = vst [vmem:[#allocation7 + $0xd0] sm:$0xff] %v676
    %741 = vst [vmem:[#allocation7 + $0xd8] sm:$0xff] %v677
    %742 = vst [vmem:[#allocation7 + $0xe0] sm:$0xff] %v678
    %743 = vst [vmem:[#allocation7 + $0xe8] sm:$0xff] %v679
    %744 = vst [vmem:[#allocation7 + $0xf0] sm:$0xff] %v680
    %745 = vst [vmem:[#allocation7 + $0xf8] sm:$0xff] %v681
    %746 = vst [vmem:[#allocation7 + $0x100] sm:$0xff] %v682
    %747 = vst [vmem:[#allocation7 + $0x108] sm:$0xff] %v683
    %748 = vst [vmem:[#allocation7 + $0x110] sm:$0xff] %v684
    %749 = vst [vmem:[#allocation7 + $0x118] sm:$0xff] %v685
    %750 = vst [vmem:[#allocation7 + $0x120] sm:$0xff] %v686
    %751 = vst [vmem:[#allocation7 + $0x128] sm:$0xff] %v687
    %752 = vst [vmem:[#allocation7 + $0x130] sm:$0xff] %v688
    %753 = vst [vmem:[#allocation7 + $0x138] sm:$0xff] %v689
    %754 = vst [vmem:[#allocation7 + $0x140] sm:$0xff] %v690
    %755 = vst [vmem:[#allocation7 + $0x148] sm:$0xff] %v691
    %756 = vst [vmem:[#allocation7 + $0x150] sm:$0xff] %v692
    %757 = vst [vmem:[#allocation7 + $0x158] sm:$0xff] %v693
    %758 = vst [vmem:[#allocation7 + $0x160] sm:$0xff] %v694
    %759 = vst [vmem:[#allocation7 + $0x168] sm:$0xff] %v695
    %760 = vst [vmem:[#allocation7 + $0x170] sm:$0xff] %v696
    %761 = vst [vmem:[#allocation7 + $0x178] sm:$0xff] %v697
    %762 = vst [vmem:[#allocation7 + $0x180] sm:$0xff] %v698
    %763 = vst [vmem:[#allocation7 + $0x188] sm:$0xff] %v699
    %764 = vst [vmem:[#allocation7 + $0x190] sm:$0xff] %v700
    %765 = vst [vmem:[#allocation7 + $0x198] sm:$0xff] %v701
    %766 = vst [vmem:[#allocation7 + $0x1a0] sm:$0xff] %v702
    %767 = vst [vmem:[#allocation7 + $0x1a8] sm:$0xff] %v703
    %768 = vst [vmem:[#allocation7 + $0x1b0] sm:$0xff] %v704
    %769 = vst [vmem:[#allocation7 + $0x1b8] sm:$0xff] %v705
    %770 = vst [vmem:[#allocation7 + $0x1c0] sm:$0xff] %v706
    %771 = vst [vmem:[#allocation7 + $0x1c8] sm:$0xff] %v707
    %772 = vst [vmem:[#allocation7 + $0x1d0] sm:$0xff] %v708
    %773 = vst [vmem:[#allocation7 + $0x1d8] sm:$0xff] %v709
    %774 = vst [vmem:[#allocation7 + $0x1e0] sm:$0xff] %v710
    %775 = vst [vmem:[#allocation7 + $0x1e8] sm:$0xff] %v711
    %776 = vst [vmem:[#allocation7 + $0x1f0] sm:$0xff] %v712
    %777 = vst [vmem:[#allocation7 + $0x1f8] sm:$0xff] %v713
    // Predicated region
    $region18: #{tpu_custom_call.1} parent=1 // pred_check
      _
    $region19: #{tpu_custom_call.1} parent=1 // pred_check_branch
      %779 = sbr.rel (0) target = $region21
    $region20: #{tpu_custom_call.1} parent=1 // pred_region
      %s781 = ssub.s32 8192, 8192
      %782 = vsyncadd [#allocation4], %s781
      %s783 = sshll.u32 [#allocation7], 4
      %s784 = int_to_ptr.vmem [resolvable:$true] %s783
      %789 = dma.vmem_to_hbm [thread:$0]  %s784, 8192, %s2, [#allocation4], 128, 128, 8
    $region21: #{tpu_custom_call.1} parent=1 // pred_fallthru
      _
    // Predicated region
    $region22: #{tpu_custom_call.1} parent=1 // pred_check
      _
    $region23: #{tpu_custom_call.1} parent=1 // pred_check_branch
      %791 = sbr.rel (0) target = $region25
    $region24: #{tpu_custom_call.1} parent=1 // pred_region
      %792 = dma.done [#allocation4], 8192
    $region25: #{tpu_custom_call.1} parent=1 // pred_fallthru
      _
    %793 = vsyncpa [#allocation3], 1
    %794 = vsyncpa [#allocation6], 1
    %795 = vsyncpa [#allocation4], 1

</llo_original>
